<compile_context>
chip_gen: v5e
topology: v5e:2x2
jax: 0.10.0
libtpu: 0.0.40
codegen_flags: <defaults>
</compile_context>

<pallas_src>
import jax
import jax.numpy as jnp
from jax.experimental import pallas as pl
from jax.experimental.pallas import tpu as pltpu


def _round_up(x, m):
    return ((x + m - 1) // m) * m


def mlr_kernel(x_ref, w_ref, b_ref, o_ref):
    # Linear layer: (tm, D) @ (D, Np) -> (tm, Np), f32 accumulation on the MXU.
    logits = jnp.dot(x_ref[...], w_ref[...], preferred_element_type=jnp.float32)
    # Bias broadcast (1, Np).  Padded class lanes carry bias = -1e30, which
    # makes them vanish from the softmax reduction (no in-kernel masking).
    logits = logits + b_ref[...]

    # Numerically stable log-softmax along the class (lane) axis.
    m = jnp.max(logits, axis=-1, keepdims=True)
    shifted = logits - m
    lse = jnp.log(jnp.sum(jnp.exp(shifted), axis=-1, keepdims=True))
    o_ref[...] = (shifted - lse).astype(o_ref.dtype)


def mlr_forward(x, w, b, *, tm=128):
    """x: anything reshapable to (-1, dim_in).  w: (dim_in, dim_out)
    (pre-transposed vs. torch), b: (dim_out,).  Returns (B, dim_out) log-probs."""
    dim_in, dim_out = w.shape
    x2d = jnp.reshape(x, (-1, dim_in)).astype(jnp.float32)   # == x.reshape(-1, 784)
    B = x2d.shape[0]

    # Lane-dense padded class dim; sublane-aligned batch tile.
    n_pad = _round_up(dim_out, 128)
    tm = max(8, min(tm, _round_up(B, 8)))
    pB = _round_up(B, tm)

    # bf16 matmul operands (f32 accumulation inside the kernel); f32 bias.
    x_p = jnp.zeros((pB, dim_in), jnp.bfloat16).at[:B].set(x2d.astype(jnp.bfloat16))
    w_p = jnp.zeros((dim_in, n_pad), jnp.bfloat16).at[:, :dim_out].set(
        w.astype(jnp.bfloat16))
    # Padded class lanes get a huge negative bias -> excluded from the softmax.
    b_p = jnp.full((1, n_pad), -1e30, jnp.float32).at[:, :dim_out].set(
        b.astype(jnp.float32).reshape(1, dim_out))

    grid = (pB // tm,)
    cost = pl.CostEstimate(
        flops=2 * pB * dim_in * n_pad,
        transcendentals=2 * pB * n_pad,                        # exp + log
        bytes_accessed=(x_p.size * 2 + w_p.size * 2 + b_p.size * 4
                        + pB * n_pad * 4),
    )

    out = pl.pallas_call(
        mlr_kernel,
        out_shape=jax.ShapeDtypeStruct((pB, n_pad), jnp.float32),
        grid=grid,
        in_specs=[
            pl.BlockSpec((tm, dim_in), lambda i: (i, 0)),      # streamed x tiles
            pl.BlockSpec((dim_in, n_pad), lambda i: (0, 0)),   # resident weight
            pl.BlockSpec((1, n_pad), lambda i: (0, 0)),        # resident bias
        ],
        out_specs=pl.BlockSpec((tm, n_pad), lambda i: (i, 0)),
        compiler_params=pltpu.CompilerParams(
            dimension_semantics=("parallel",)),
        cost_estimate=cost,
    )(x_p, w_p, b_p)

    return out[:B, :dim_out]


def init_params(key, dim_in, dim_out):
    """Mimics torch.nn.Linear default init: U(-k, k), k = 1/sqrt(dim_in).
    Weight is stored transposed as (dim_in, dim_out)."""
    kw, kb = jax.random.split(key)
    bound = 1.0 / jnp.sqrt(jnp.float32(dim_in))
    w = jax.random.uniform(kw, (dim_in, dim_out), jnp.float32, -bound, bound)
    b = jax.random.uniform(kb, (dim_out,), jnp.float32, -bound, bound)
    return w, b


def mlr_reference(x, w, b):
    """Plain-JAX f32 reference for correctness checking."""
    x2d = jnp.reshape(x, (-1, w.shape[0])).astype(jnp.float32)
    logits = x2d @ w + b
    return jax.nn.log_softmax(logits, axis=-1)


if __name__ == "__main__":
    key = jax.random.PRNGKey(0)
    k_x, k_p = jax.random.split(key)

    # Shapes implied by the module: x.reshape(-1, 784)  ->  dim_in = 784.
    B, C, H, W = 2, 1, 28, 28
    dim_in = C * H * W          # 784
    dim_out = 10

    x = jax.random.normal(k_x, (B, C, H, W), jnp.float32)
    w, b = init_params(k_p, dim_in, dim_out)

    out = mlr_forward(x, w, b)
    out = jax.block_until_ready(out)

    ref = mlr_reference(x, w, b)
    assert out.shape == (B, dim_out), out.shape
    assert bool(jnp.all(jnp.isfinite(out))), "non-finite output"
    # bf16 matmul operands with f32 accumulation -> loosened tolerance.
    assert jnp.allclose(out, ref, atol=3e-2, rtol=3e-2), "mismatch vs reference"
    # log-softmax rows must (log-)sum to 1.
    assert jnp.allclose(jnp.sum(jnp.exp(out), axis=1), 1.0, atol=1e-3), \
        "rows not normalized"

    print("KERNEL_OK")
</pallas_src>

<mosaic_0001>
module attributes {stable_mosaic.version = 11 : i64} {
  func.func @mlr_kernel(%arg0: i32, %arg1: memref<8x784xbf16, #tpu.memory_space<vmem>>, %arg2: memref<784x128xbf16, #tpu.memory_space<vmem>>, %arg3: memref<1x128xf32, #tpu.memory_space<vmem>>, %arg4: memref<8x128xf32, #tpu.memory_space<vmem>>) attributes {dimension_semantics = [#tpu.dimension_semantics<parallel>], iteration_bounds = array<i64: 1>, scalar_prefetch = 0 : i64, scratch_operands = 0 : i64, tpu.core_type = #tpu.core_type<tc>, window_params = [{transform_indices = @transform_0, window_bounds = array<i64: 8, 784>}, {pipeline_mode = #tpu.pipeline_mode<synchronous>, transform_indices = @transform_1, window_bounds = array<i64: 784, 128>}, {pipeline_mode = #tpu.pipeline_mode<synchronous>, transform_indices = @transform_2, window_bounds = array<i64: 1, 128>}, {transform_indices = @transform_3, window_bounds = array<i64: 8, 128>}]} {
    %c0 = arith.constant 0 : index
    %c0_0 = arith.constant 0 : index
    %0 = vector.load %arg1[%c0, %c0_0] : memref<8x784xbf16, #tpu.memory_space<vmem>>, vector<8x784xbf16>
    %c0_1 = arith.constant 0 : index
    %c0_2 = arith.constant 0 : index
    %1 = vector.load %arg2[%c0_1, %c0_2] : memref<784x128xbf16, #tpu.memory_space<vmem>>, vector<784x128xbf16>
    %cst = arith.constant dense<0.000000e+00> : vector<8x128xf32>
    %2 = tpu.matmul %0, %1, %cst {dimension_numbers = #tpu.dot_dimension_numbers<[1], [0], [0], [1], [0, 0, 1, 1], [], []>} : vector<8x784xbf16>, vector<784x128xbf16>, vector<8x128xf32> -> vector<8x128xf32>
    %c0_3 = arith.constant 0 : index
    %c0_4 = arith.constant 0 : index
    %3 = vector.load %arg3[%c0_3, %c0_4] : memref<1x128xf32, #tpu.memory_space<vmem>>, vector<1x128xf32>
    %4 = vector.broadcast %3 : vector<1x128xf32> to vector<8x128xf32>
    %5 = arith.addf %2, %4 : vector<8x128xf32>
    %cst_5 = arith.constant dense<0xFF800000> : vector<8xf32>
    %6 = vector.multi_reduction <maximumf>, %5, %cst_5 [1] : vector<8x128xf32> to vector<8xf32>
    %7 = vector.shape_cast %6 : vector<8xf32> to vector<8x1xf32>
    %8 = vector.broadcast %7 : vector<8x1xf32> to vector<8x128xf32>
    %9 = arith.subf %5, %8 : vector<8x128xf32>
    %10 = math.exp %9 : vector<8x128xf32>
    %cst_6 = arith.constant dense<0.000000e+00> : vector<8xf32>
    %11 = vector.multi_reduction <add>, %10, %cst_6 [1] : vector<8x128xf32> to vector<8xf32>
    %12 = vector.shape_cast %11 : vector<8xf32> to vector<8x1xf32>
    %13 = math.log %12 : vector<8x1xf32>
    %14 = vector.broadcast %13 : vector<8x1xf32> to vector<8x128xf32>
    %15 = arith.subf %9, %14 : vector<8x128xf32>
    %c0_7 = arith.constant 0 : index
    %c0_8 = arith.constant 0 : index
    %16 = vector.load %arg4[%c0_7, %c0_8] : memref<8x128xf32, #tpu.memory_space<vmem>>, vector<8x128xf32>
    tpu.vector_store %arg4[%c0_7, %c0_8], %15 {strides = array<i32>} : memref<8x128xf32, #tpu.memory_space<vmem>>, vector<8x128xf32>,
    return
  }
  func.func @transform_0(%arg0: i32) -> (i32, i32) {
    %c0_i32 = arith.constant 0 : i32
    %c0_i32_0 = arith.constant 0 : i32
    return %arg0, %c0_i32 : i32, i32
  }
  func.func @transform_1(%arg0: i32) -> (i32, i32) {
    %c0_i32 = arith.constant 0 : i32
    %c0_i32_0 = arith.constant 0 : i32
    %c0_i32_1 = arith.constant 0 : i32
    return %c0_i32, %c0_i32_0 : i32, i32
  }
  func.func @transform_2(%arg0: i32) -> (i32, i32) {
    %c0_i32 = arith.constant 0 : i32
    %c0_i32_0 = arith.constant 0 : i32
    %c0_i32_1 = arith.constant 0 : i32
    return %c0_i32, %c0_i32_0 : i32, i32
  }
  func.func @transform_3(%arg0: i32) -> (i32, i32) {
    %c0_i32 = arith.constant 0 : i32
    %c0_i32_0 = arith.constant 0 : i32
    return %arg0, %c0_i32 : i32, i32
  }
}

</mosaic_0001>

<llo_original>
// kernel: tpu_custom_call.1
$region0: #{tpu_custom_call.1}
  #allocation0 [shape = 'u32[]', space=smem, size = 0x4, offset = 0x4, fixed_abs, tag = 'smem constant byte address 0x4 - core index']
  #allocation1 [shape = 'u32[72,128]{1,0:T(1,128)}', space=vmem, size = 0x9000, scoped, tag = 'internal scratch']
  %s0 = inlined_call_operand.hbm [shape: bf16[8,784], index: 0, kind: input, shape index: {}]
  %s1 = inlined_call_operand.hbm [shape: bf16[784,128], index: 1, kind: input, shape index: {}]
  %s2 = inlined_call_operand.vmem [shape: f32[1,128], index: 2, kind: input, shape index: {}]
  %s3 = inlined_call_operand.hbm [shape: f32[8,128], index: 3, kind: output, shape index: {}]
  %s4 = sld [smem:[#allocation0]]
  $region30: #{tpu_custom_call.1} parent=0
    _
  %s6 = ssub.s32 1, %s4
  %s7 = scalar_select 0, %s6, %s4
  $region1: #{tpu_custom_call.1} parent=0
    #allocation2 [shape = 'u8[14336]{0}', space=vmem, size = 0x3800, scoped, tag = 'input window, operand 0, single buffered']
    #allocation3 [shape = 's32[1]{0}', space=sflag, size = 0x4, scoped, tag = 'scoped memory for tpu_custom_call.1']
    #allocation4 [shape = 's32[1]{0}', space=sflag, size = 0x4, scoped, tag = 'scoped memory for tpu_custom_call.1']
    #allocation5 [shape = 'u8[200704]{0}', space=vmem, size = 0x31000, scoped, tag = 'input window, operand 1, single buffered']
    #allocation6 [shape = 's32[1]{0}', space=sflag, size = 0x4, scoped, tag = 'scoped memory for tpu_custom_call.1']
    #allocation7 [shape = 'u8[4096]{0}', space=vmem, size = 0x1000, scoped, tag = 'output window, operand 0, single buffered']
    %8 = vsyncpa [#allocation3], 0
    %9 = vsyncpa [#allocation6], 0
    %10 = vsyncpa [#allocation4], 0
    // Predicated region
    $region2: #{tpu_custom_call.1} parent=1 // pred_check
      _
    $region3: #{tpu_custom_call.1} parent=1 // pred_check_branch
      %12 = sbr.rel (0) target = $region5
    $region4: #{tpu_custom_call.1} parent=1 // pred_region
      %14 = vsyncadd [#allocation3], 0
      %s16 = sshll.u32 %s0, 4
      %s17 = int_to_ptr.hbm [resolvable:$true] %s16
      %s18 = sshll.u32 [#allocation2], 4
      %s19 = int_to_ptr.vmem [resolvable:$true] %s18
      %21 = dma.hbm_to_vmem [thread:$0]  %s17, 448, %s19, [#allocation3]
    $region5: #{tpu_custom_call.1} parent=1 // pred_fallthru
      _
    // Predicated region
    $region6: #{tpu_custom_call.1} parent=1 // pred_check
      _
    $region7: #{tpu_custom_call.1} parent=1 // pred_check_branch
      %23 = sbr.rel (0) target = $region9
    $region8: #{tpu_custom_call.1} parent=1 // pred_region
      %25 = vsyncadd [#allocation6], 0
      %s26 = sshll.u32 %s1, 4
      %s27 = int_to_ptr.hbm [resolvable:$true] %s26
      %s28 = sshll.u32 [#allocation5], 4
      %s29 = int_to_ptr.vmem [resolvable:$true] %s28
      %34 = dma.hbm_to_vmem [thread:$0]  %s27, 6272, %s29, [#allocation6], 64, 64, 4
    $region9: #{tpu_custom_call.1} parent=1 // pred_fallthru
      _
    // Predicated region
    $region10: #{tpu_custom_call.1} parent=1 // pred_check
      _
    $region11: #{tpu_custom_call.1} parent=1 // pred_check_branch
      %36 = sbr.rel (0) target = $region13
    $region12: #{tpu_custom_call.1} parent=1 // pred_region
      _
    $region13: #{tpu_custom_call.1} parent=1 // pred_fallthru
      _
    // Predicated region
    $region14: #{tpu_custom_call.1} parent=1 // pred_check
      _
    $region15: #{tpu_custom_call.1} parent=1 // pred_check_branch
      %38 = sbr.rel (0) target = $region17
    $region16: #{tpu_custom_call.1} parent=1 // pred_region
      %40 = dma.done [#allocation3], 448
    $region17: #{tpu_custom_call.1} parent=1 // pred_fallthru
      _
    // Predicated region
    $region18: #{tpu_custom_call.1} parent=1 // pred_check
      _
    $region19: #{tpu_custom_call.1} parent=1 // pred_check_branch
      %42 = sbr.rel (0) target = $region21
    $region20: #{tpu_custom_call.1} parent=1 // pred_region
      %44 = dma.done [#allocation6], 6272
    $region21: #{tpu_custom_call.1} parent=1 // pred_fallthru
      _
    %v46 = vld [vmem:[#allocation2] sm:$0xff]
    %v47 = vld [vmem:[#allocation2 + $0x8] sm:$0xff]
    %v48 = vld [vmem:[#allocation2 + $0x10] sm:$0xff]
    %v49 = vld [vmem:[#allocation2 + $0x18] sm:$0xf]
    %v50 = vld [vmem:[#allocation5] sm:$0xf]
    %v51 = vld [vmem:[#allocation5 + $0x4] sm:$0xf]
    %v52 = vld [vmem:[#allocation5 + $0x8] sm:$0xf]
    %v53 = vld [vmem:[#allocation5 + $0xc] sm:$0xf]
    %v54 = vld [vmem:[#allocation5 + $0x10] sm:$0xf]
    %v55 = vld [vmem:[#allocation5 + $0x14] sm:$0xf]
    %v56 = vld [vmem:[#allocation5 + $0x18] sm:$0xf]
    %v57 = vld [vmem:[#allocation5 + $0x1c] sm:$0xf]
    %v58 = vld [vmem:[#allocation5 + $0x20] sm:$0xf]
    %v59 = vld [vmem:[#allocation5 + $0x24] sm:$0xf]
    %v60 = vld [vmem:[#allocation5 + $0x28] sm:$0xf]
    %v61 = vld [vmem:[#allocation5 + $0x2c] sm:$0xf]
    %v62 = vld [vmem:[#allocation5 + $0x30] sm:$0xf]
    %v63 = vld [vmem:[#allocation5 + $0x34] sm:$0xf]
    %v64 = vld [vmem:[#allocation5 + $0x38] sm:$0xf]
    %v65 = vld [vmem:[#allocation5 + $0x3c] sm:$0xf]
    %v66 = vld [vmem:[#allocation5 + $0x40] sm:$0xf]
    %v67 = vld [vmem:[#allocation5 + $0x44] sm:$0xf]
    %v68 = vld [vmem:[#allocation5 + $0x48] sm:$0xf]
    %v69 = vld [vmem:[#allocation5 + $0x4c] sm:$0xf]
    %v70 = vld [vmem:[#allocation5 + $0x50] sm:$0xf]
    %v71 = vld [vmem:[#allocation5 + $0x54] sm:$0xf]
    %v72 = vld [vmem:[#allocation5 + $0x58] sm:$0xf]
    %v73 = vld [vmem:[#allocation5 + $0x5c] sm:$0xf]
    %v74 = vld [vmem:[#allocation5 + $0x60] sm:$0xf]
    %v75 = vld [vmem:[#allocation5 + $0x64] sm:$0xf]
    %v76 = vld [vmem:[#allocation5 + $0x68] sm:$0xf]
    %v77 = vld [vmem:[#allocation5 + $0x6c] sm:$0xf]
    %v78 = vld [vmem:[#allocation5 + $0x70] sm:$0xf]
    %v79 = vld [vmem:[#allocation5 + $0x74] sm:$0xf]
    %v80 = vld [vmem:[#allocation5 + $0x78] sm:$0xf]
    %v81 = vld [vmem:[#allocation5 + $0x7c] sm:$0xf]
    %v82 = vld [vmem:[#allocation5 + $0x80] sm:$0xf]
    %v83 = vld [vmem:[#allocation5 + $0x84] sm:$0xf]
    %v84 = vld [vmem:[#allocation5 + $0x88] sm:$0xf]
    %v85 = vld [vmem:[#allocation5 + $0x8c] sm:$0xf]
    %v86 = vld [vmem:[#allocation5 + $0x90] sm:$0xf]
    %v87 = vld [vmem:[#allocation5 + $0x94] sm:$0xf]
    %v88 = vld [vmem:[#allocation5 + $0x98] sm:$0xf]
    %v89 = vld [vmem:[#allocation5 + $0x9c] sm:$0xf]
    %v90 = vld [vmem:[#allocation5 + $0xa0] sm:$0xf]
    %v91 = vld [vmem:[#allocation5 + $0xa4] sm:$0xf]
    %v92 = vld [vmem:[#allocation5 + $0xa8] sm:$0xf]
    %v93 = vld [vmem:[#allocation5 + $0xac] sm:$0xf]
    %v94 = vld [vmem:[#allocation5 + $0xb0] sm:$0xf]
    %v95 = vld [vmem:[#allocation5 + $0xb4] sm:$0xf]
    %v96 = vld [vmem:[#allocation5 + $0xb8] sm:$0xf]
    %v97 = vld [vmem:[#allocation5 + $0xbc] sm:$0xf]
    %v98 = vld [vmem:[#allocation5 + $0xc0] sm:$0xf]
    %v99 = vld [vmem:[#allocation5 + $0xc4] sm:$0xf]
    %v100 = vld [vmem:[#allocation5 + $0xc8] sm:$0xf]
    %v101 = vld [vmem:[#allocation5 + $0xcc] sm:$0xf]
    %v102 = vld [vmem:[#allocation5 + $0xd0] sm:$0xf]
    %v103 = vld [vmem:[#allocation5 + $0xd4] sm:$0xf]
    %v104 = vld [vmem:[#allocation5 + $0xd8] sm:$0xf]
    %v105 = vld [vmem:[#allocation5 + $0xdc] sm:$0xf]
    %v106 = vld [vmem:[#allocation5 + $0xe0] sm:$0xf]
    %v107 = vld [vmem:[#allocation5 + $0xe4] sm:$0xf]
    %v108 = vld [vmem:[#allocation5 + $0xe8] sm:$0xf]
    %v109 = vld [vmem:[#allocation5 + $0xec] sm:$0xf]
    %v110 = vld [vmem:[#allocation5 + $0xf0] sm:$0xf]
    %v111 = vld [vmem:[#allocation5 + $0xf4] sm:$0xf]
    %v112 = vld [vmem:[#allocation5 + $0xf8] sm:$0xf]
    %v113 = vld [vmem:[#allocation5 + $0xfc] sm:$0xf]
    %v114 = vld [vmem:[#allocation5 + $0x100] sm:$0xf]
    %v115 = vld [vmem:[#allocation5 + $0x104] sm:$0xf]
    %v116 = vld [vmem:[#allocation5 + $0x108] sm:$0xf]
    %v117 = vld [vmem:[#allocation5 + $0x10c] sm:$0xf]
    %v118 = vld [vmem:[#allocation5 + $0x110] sm:$0xf]
    %v119 = vld [vmem:[#allocation5 + $0x114] sm:$0xf]
    %v120 = vld [vmem:[#allocation5 + $0x118] sm:$0xf]
    %v121 = vld [vmem:[#allocation5 + $0x11c] sm:$0xf]
    %v122 = vld [vmem:[#allocation5 + $0x120] sm:$0xf]
    %v123 = vld [vmem:[#allocation5 + $0x124] sm:$0xf]
    %v124 = vld [vmem:[#allocation5 + $0x128] sm:$0xf]
    %v125 = vld [vmem:[#allocation5 + $0x12c] sm:$0xf]
    %v126 = vld [vmem:[#allocation5 + $0x130] sm:$0xf]
    %v127 = vld [vmem:[#allocation5 + $0x134] sm:$0xf]
    %v128 = vld [vmem:[#allocation5 + $0x138] sm:$0xf]
    %v129 = vld [vmem:[#allocation5 + $0x13c] sm:$0xf]
    %v130 = vld [vmem:[#allocation5 + $0x140] sm:$0xf]
    %v131 = vld [vmem:[#allocation5 + $0x144] sm:$0xf]
    %v132 = vld [vmem:[#allocation5 + $0x148] sm:$0xf]
    %v133 = vld [vmem:[#allocation5 + $0x14c] sm:$0xf]
    %v134 = vld [vmem:[#allocation5 + $0x150] sm:$0xf]
    %v135 = vld [vmem:[#allocation5 + $0x154] sm:$0xf]
    %v136 = vld [vmem:[#allocation5 + $0x158] sm:$0xf]
    %v137 = vld [vmem:[#allocation5 + $0x15c] sm:$0xf]
    %v138 = vld [vmem:[#allocation5 + $0x160] sm:$0xf]
    %v139 = vld [vmem:[#allocation5 + $0x164] sm:$0xf]
    %v140 = vld [vmem:[#allocation5 + $0x168] sm:$0xf]
    %v141 = vld [vmem:[#allocation5 + $0x16c] sm:$0xf]
    %v142 = vld [vmem:[#allocation5 + $0x170] sm:$0xf]
    %v143 = vld [vmem:[#allocation5 + $0x174] sm:$0xf]
    %v144 = vld [vmem:[#allocation5 + $0x178] sm:$0xf]
    %v145 = vld [vmem:[#allocation5 + $0x17c] sm:$0xf]
    %v146 = vld [vmem:[#allocation5 + $0x180] sm:$0xf]
    %v147 = vld [vmem:[#allocation5 + $0x184] sm:$0xf]
    %v148 = vld [vmem:[%s2] sm:$0x1]
    %v150 = vperm.slane %v148, 0
    %v156 = vunpack.c.l.b16 %v46
    %v157 = vunpack.c.h.b16 %v46
    %v158 = vunpack.c.l.b16 %v47
    %v159 = vunpack.c.h.b16 %v47
    %v160 = vunpack.c.l.b16 %v48
    %v161 = vunpack.c.h.b16 %v48
    %v162 = vunpack.c.l.b16 %v49
    %v163 = vpack.c.b16 %v156, %v156
    %v164 = vpack.c.b16 %v157, %v157
    %v165 = vpack.c.b16 %v158, %v158
    %v166 = vpack.c.b16 %v159, %v159
    %v167 = vpack.c.b16 %v160, %v160
    %v168 = vpack.c.b16 %v161, %v161
    %v169 = vpack.c.b16 %v162, %v162
    %v274 = vunpack.c.l.b16 %v50
    %v275 = vunpack.c.l.b16 %v51
    %v276 = vunpack.c.l.b16 %v52
    %v277 = vunpack.c.l.b16 %v53
    %v278 = vunpack.c.l.b16 %v54
    %v279 = vunpack.c.l.b16 %v55
    %v280 = vunpack.c.l.b16 %v56
    %v281 = vunpack.c.l.b16 %v57
    %v282 = vunpack.c.l.b16 %v58
    %v283 = vunpack.c.l.b16 %v59
    %v284 = vunpack.c.l.b16 %v60
    %v285 = vunpack.c.l.b16 %v61
    %v286 = vunpack.c.l.b16 %v62
    %v287 = vunpack.c.l.b16 %v63
    %v288 = vunpack.c.l.b16 %v64
    %v289 = vunpack.c.l.b16 %v65
    %v290 = vunpack.c.l.b16 %v66
    %v291 = vunpack.c.l.b16 %v67
    %v292 = vunpack.c.l.b16 %v68
    %v293 = vunpack.c.l.b16 %v69
    %v294 = vunpack.c.l.b16 %v70
    %v295 = vunpack.c.l.b16 %v71
    %v296 = vunpack.c.l.b16 %v72
    %v297 = vunpack.c.l.b16 %v73
    %v298 = vunpack.c.l.b16 %v74
    %v299 = vunpack.c.l.b16 %v75
    %v300 = vunpack.c.l.b16 %v76
    %v301 = vunpack.c.l.b16 %v77
    %v302 = vunpack.c.l.b16 %v78
    %v303 = vunpack.c.l.b16 %v79
    %v304 = vunpack.c.l.b16 %v80
    %v305 = vunpack.c.l.b16 %v81
    %v306 = vunpack.c.l.b16 %v82
    %v307 = vunpack.c.l.b16 %v83
    %v308 = vunpack.c.l.b16 %v84
    %v309 = vunpack.c.l.b16 %v85
    %v310 = vunpack.c.l.b16 %v86
    %v311 = vunpack.c.l.b16 %v87
    %v312 = vunpack.c.l.b16 %v88
    %v313 = vunpack.c.l.b16 %v89
    %v314 = vunpack.c.l.b16 %v90
    %v315 = vunpack.c.l.b16 %v91
    %v316 = vunpack.c.l.b16 %v92
    %v317 = vunpack.c.l.b16 %v93
    %v318 = vunpack.c.l.b16 %v94
    %v319 = vunpack.c.l.b16 %v95
    %v320 = vunpack.c.l.b16 %v96
    %v321 = vunpack.c.l.b16 %v97
    %v322 = vunpack.c.l.b16 %v98
    %v323 = vunpack.c.l.b16 %v99
    %v324 = vunpack.c.l.b16 %v100
    %v325 = vunpack.c.l.b16 %v101
    %v326 = vunpack.c.l.b16 %v102
    %v327 = vunpack.c.l.b16 %v103
    %v328 = vunpack.c.l.b16 %v104
    %v329 = vunpack.c.l.b16 %v105
    %v330 = vunpack.c.l.b16 %v106
    %v331 = vunpack.c.l.b16 %v107
    %v332 = vunpack.c.l.b16 %v108
    %v333 = vunpack.c.l.b16 %v109
    %v334 = vunpack.c.l.b16 %v110
    %v335 = vunpack.c.l.b16 %v111
    %v336 = vunpack.c.l.b16 %v112
    %v337 = vunpack.c.l.b16 %v113
    %v338 = vunpack.c.l.b16 %v114
    %v339 = vunpack.c.l.b16 %v115
    %v340 = vunpack.c.l.b16 %v116
    %v341 = vunpack.c.l.b16 %v117
    %v342 = vunpack.c.l.b16 %v118
    %v343 = vunpack.c.l.b16 %v119
    %v344 = vunpack.c.l.b16 %v120
    %v345 = vunpack.c.l.b16 %v121
    %v346 = vunpack.c.l.b16 %v122
    %v347 = vunpack.c.l.b16 %v123
    %v348 = vunpack.c.l.b16 %v124
    %v349 = vunpack.c.l.b16 %v125
    %v350 = vunpack.c.l.b16 %v126
    %v351 = vunpack.c.l.b16 %v127
    %v352 = vunpack.c.l.b16 %v128
    %v353 = vunpack.c.l.b16 %v129
    %v354 = vunpack.c.l.b16 %v130
    %v355 = vunpack.c.l.b16 %v131
    %v356 = vunpack.c.l.b16 %v132
    %v357 = vunpack.c.l.b16 %v133
    %v358 = vunpack.c.l.b16 %v134
    %v359 = vunpack.c.l.b16 %v135
    %v360 = vunpack.c.l.b16 %v136
    %v361 = vunpack.c.l.b16 %v137
    %v362 = vunpack.c.l.b16 %v138
    %v363 = vunpack.c.l.b16 %v139
    %v364 = vunpack.c.l.b16 %v140
    %v365 = vunpack.c.l.b16 %v141
    %v366 = vunpack.c.l.b16 %v142
    %v367 = vunpack.c.l.b16 %v143
    %v368 = vunpack.c.l.b16 %v144
    %v369 = vunpack.c.l.b16 %v145
    %v370 = vunpack.c.l.b16 %v146
    %v371 = vunpack.c.l.b16 %v147
    %v372 = vpack.c.b16 %v275, %v274
    %v373 = vpack.c.b16 %v277, %v276
    %v374 = vpack.c.b16 %v279, %v278
    %v375 = vpack.c.b16 %v281, %v280
    %v376 = vpack.c.b16 %v283, %v282
    %v377 = vpack.c.b16 %v285, %v284
    %v378 = vpack.c.b16 %v287, %v286
    %v379 = vpack.c.b16 %v289, %v288
    %v380 = vpack.c.b16 %v291, %v290
    %v381 = vpack.c.b16 %v293, %v292
    %v382 = vpack.c.b16 %v295, %v294
    %v383 = vpack.c.b16 %v297, %v296
    %v384 = vpack.c.b16 %v299, %v298
    %v385 = vpack.c.b16 %v301, %v300
    %v386 = vpack.c.b16 %v303, %v302
    %v387 = vpack.c.b16 %v305, %v304
    %v388 = vpack.c.b16 %v307, %v306
    %v389 = vpack.c.b16 %v309, %v308
    %v390 = vpack.c.b16 %v311, %v310
    %v391 = vpack.c.b16 %v313, %v312
    %v392 = vpack.c.b16 %v315, %v314
    %v393 = vpack.c.b16 %v317, %v316
    %v394 = vpack.c.b16 %v319, %v318
    %v395 = vpack.c.b16 %v321, %v320
    %v396 = vpack.c.b16 %v323, %v322
    %v397 = vpack.c.b16 %v325, %v324
    %v398 = vpack.c.b16 %v327, %v326
    %v399 = vpack.c.b16 %v329, %v328
    %v400 = vpack.c.b16 %v331, %v330
    %v401 = vpack.c.b16 %v333, %v332
    %v402 = vpack.c.b16 %v335, %v334
    %v403 = vpack.c.b16 %v337, %v336
    %v404 = vpack.c.b16 %v339, %v338
    %v405 = vpack.c.b16 %v341, %v340
    %v406 = vpack.c.b16 %v343, %v342
    %v407 = vpack.c.b16 %v345, %v344
    %v408 = vpack.c.b16 %v347, %v346
    %v409 = vpack.c.b16 %v349, %v348
    %v410 = vpack.c.b16 %v351, %v350
    %v411 = vpack.c.b16 %v353, %v352
    %v412 = vpack.c.b16 %v355, %v354
    %v413 = vpack.c.b16 %v357, %v356
    %v414 = vpack.c.b16 %v359, %v358
    %v415 = vpack.c.b16 %v361, %v360
    %v416 = vpack.c.b16 %v363, %v362
    %v417 = vpack.c.b16 %v365, %v364
    %v418 = vpack.c.b16 %v367, %v366
    %v419 = vpack.c.b16 %v369, %v368
    %v420 = vpack.c.b16 %v371, %v370
    %vm470 = vcmask 130048
    %v472 = vsel %vm470, %v169, 0
    %474 = vmatpush.bf16.msra.mxu0 %v379
    %475 = vmatpush.bf16.msra.mxu0 %v378
    %476 = vmatpush.bf16.msra.mxu0 %v377
    %477 = vmatpush.bf16.msra.mxu0 %v376
    %478 = vmatpush.bf16.msra.mxu0 %v375
    %479 = vmatpush.bf16.msra.mxu0 %v374
    %480 = vmatpush.bf16.msra.mxu0 %v373
    %481 = vmatpush.bf16.msra.mxu0 %v372
    %482 = vmatmul.bf16.gmra.mxu0 %v163
    %v483 = vpop.f32.mrf.mxu0
    %v484 = vadd.f32 %v150, %v483
    %v485 = vpop.f32.mrf.mxu0
    %486 = vdwg.mxu0
    %487 = vmatpush.bf16.msra.mxu0 %v387
    %488 = vmatpush.bf16.msra.mxu0 %v386
    %489 = vmatpush.bf16.msra.mxu0 %v385
    %490 = vmatpush.bf16.msra.mxu0 %v384
    %491 = vmatpush.bf16.msra.mxu0 %v383
    %492 = vmatpush.bf16.msra.mxu0 %v382
    %493 = vmatpush.bf16.msra.mxu0 %v381
    %494 = vmatpush.bf16.msra.mxu0 %v380
    %495 = vmatmul.bf16.gmra.mxu0 %v164
    %v496 = vpop.f32.mrf.mxu0
    %v497 = vadd.f32 %v484, %v496
    %v498 = vpop.f32.mrf.mxu0
    %499 = vdwg.mxu0
    %500 = vmatpush.bf16.msra.mxu0 %v395
    %501 = vmatpush.bf16.msra.mxu0 %v394
    %502 = vmatpush.bf16.msra.mxu0 %v393
    %503 = vmatpush.bf16.msra.mxu0 %v392
    %504 = vmatpush.bf16.msra.mxu0 %v391
    %505 = vmatpush.bf16.msra.mxu0 %v390
    %506 = vmatpush.bf16.msra.mxu0 %v389
    %507 = vmatpush.bf16.msra.mxu0 %v388
    %508 = vmatmul.bf16.gmra.mxu0 %v165
    %v509 = vpop.f32.mrf.mxu0
    %v510 = vadd.f32 %v497, %v509
    %v511 = vpop.f32.mrf.mxu0
    %512 = vdwg.mxu0
    %513 = vmatpush.bf16.msra.mxu0 %v403
    %514 = vmatpush.bf16.msra.mxu0 %v402
    %515 = vmatpush.bf16.msra.mxu0 %v401
    %516 = vmatpush.bf16.msra.mxu0 %v400
    %517 = vmatpush.bf16.msra.mxu0 %v399
    %518 = vmatpush.bf16.msra.mxu0 %v398
    %519 = vmatpush.bf16.msra.mxu0 %v397
    %520 = vmatpush.bf16.msra.mxu0 %v396
    %521 = vmatmul.bf16.gmra.mxu0 %v166
    %v522 = vpop.f32.mrf.mxu0
    %v523 = vadd.f32 %v510, %v522
    %v524 = vpop.f32.mrf.mxu0
    %525 = vdwg.mxu0
    %526 = vmatpush.bf16.msra.mxu0 %v411
    %527 = vmatpush.bf16.msra.mxu0 %v410
    %528 = vmatpush.bf16.msra.mxu0 %v409
    %529 = vmatpush.bf16.msra.mxu0 %v408
    %530 = vmatpush.bf16.msra.mxu0 %v407
    %531 = vmatpush.bf16.msra.mxu0 %v406
    %532 = vmatpush.bf16.msra.mxu0 %v405
    %533 = vmatpush.bf16.msra.mxu0 %v404
    %534 = vmatmul.bf16.gmra.mxu0 %v167
    %v535 = vpop.f32.mrf.mxu0
    %v536 = vadd.f32 %v523, %v535
    %v537 = vpop.f32.mrf.mxu0
    %538 = vdwg.mxu0
    %539 = vmatpush.bf16.msra.mxu0 %v419
    %540 = vmatpush.bf16.msra.mxu0 %v418
    %541 = vmatpush.bf16.msra.mxu0 %v417
    %542 = vmatpush.bf16.msra.mxu0 %v416
    %543 = vmatpush.bf16.msra.mxu0 %v415
    %544 = vmatpush.bf16.msra.mxu0 %v414
    %545 = vmatpush.bf16.msra.mxu0 %v413
    %546 = vmatpush.bf16.msra.mxu0 %v412
    %547 = vmatmul.bf16.gmra.mxu0 %v168
    %v548 = vpop.f32.mrf.mxu0
    %v549 = vadd.f32 %v536, %v548
    %v550 = vpop.f32.mrf.mxu0
    %551 = vdwg.mxu0
    %552 = vmatpush.bf16.msra.mxu0 0
    %553 = vmatpush.bf16.msra.mxu0 0
    %554 = vmatpush.bf16.msra.mxu0 0
    %555 = vmatpush.bf16.msra.mxu0 0
    %556 = vmatpush.bf16.msra.mxu0 0
    %557 = vmatpush.bf16.msra.mxu0 0
    %558 = vmatpush.bf16.msra.mxu0 0
    %559 = vmatpush.bf16.msra.mxu0 %v420
    %560 = vmatmul.bf16.gmra.mxu0 %v472
    %v561 = vpop.f32.mrf.mxu0
    %v562 = vadd.f32 %v549, %v561
    %v563 = vpop.f32.mrf.mxu0
    %564 = vdwg.mxu0
    %565 = vmax.xlane.f32.xlu0 %v562
    %v566 = vpop.xlane.xlu0 %565
    %v567 = vsub.f32 %v562, %v566
    %v568 = vmul.f32 %v567, 1.442695
    %v569 = vpow.pop %v568
    %570 = vadd.xlane.f32.xlu0 %v569
    %v571 = vpop.xlane.xlu0 %570
    %v572 = vlog2.pop %v571
    %v573 = vmul.f32 %v572, 0.6931472
    %v574 = vsub.f32 %v567, %v573
    %575 = vst [vmem:[#allocation7] sm:$0xff] %v574
    // Predicated region
    $region22: #{tpu_custom_call.1} parent=1 // pred_check
      _
    $region23: #{tpu_custom_call.1} parent=1 // pred_check_branch
      %577 = sbr.rel (0) target = $region25
    $region24: #{tpu_custom_call.1} parent=1 // pred_region
      %579 = vsyncadd [#allocation4], 0
      %s581 = sshll.u32 [#allocation7], 4
      %s582 = int_to_ptr.vmem [resolvable:$true] %s581
      %s583 = sshll.u32 %s3, 4
      %s584 = int_to_ptr.hbm [resolvable:$true] %s583
      %586 = dma.vmem_to_hbm [thread:$0]  %s582, 128, %s584, [#allocation4]
    $region25: #{tpu_custom_call.1} parent=1 // pred_fallthru
      _
    // Predicated region
    $region26: #{tpu_custom_call.1} parent=1 // pred_check
      _
    $region27: #{tpu_custom_call.1} parent=1 // pred_check_branch
      %588 = sbr.rel (0) target = $region29
    $region28: #{tpu_custom_call.1} parent=1 // pred_region
      %590 = dma.done [#allocation4], 128
    $region29: #{tpu_custom_call.1} parent=1 // pred_fallthru
      _
    %591 = vsyncpa [#allocation3], 1
    %592 = vsyncpa [#allocation6], 1
    %593 = vsyncpa [#allocation4], 1

</llo_original>
